<compile_context>
chip_gen: v6e
topology: v6e:2x2x1
jax: 0.10.0
libtpu: 0.0.40
codegen_flags: <defaults>
</compile_context>

<pallas_src>
import jax
import jax.numpy as jnp
from jax.experimental import pallas as pl
from jax.experimental.pallas import tpu as pltpu


# ----------------------------------------------------------------------------
# Kernels
# ----------------------------------------------------------------------------
def _fc1_stream_kernel(x_ref, w1_ref, part_ref):
    """Stream one (tk, hidden) W1 tile + matching (B, tk) x tile per grid step
    and accumulate x @ W1 into the resident per-split partial.

    grid = (S, KS): axis 0 = core split ("parallel"; shards the K stream across
    TensorCores on multi-core chips), axis 1 = K tiles ("arbitrary", reduction).
    part_ref's block index only depends on axis 0, so it stays resident in VMEM
    across the whole reduction and acts as the accumulator.
    """
    k = pl.program_id(1)

    @pl.when(k == 0)
    def _():
        part_ref[...] = jnp.zeros_like(part_ref)

    part_ref[...] += jnp.dot(
        x_ref[...], w1_ref[...], preferred_element_type=jnp.float32
    )[None, :, :]


def _fc_epilogue_kernel(part_ref, b1_ref, w2_ref, b2_ref, o_ref):
    """Combine per-split fc1 partials, then bias1 + ReLU + fc2 + bias2 in f32."""
    pre = jnp.sum(part_ref[...], axis=0) + b1_ref[...]          # (B, hidden)
    h = jnp.maximum(pre, 0.0)                                    # ReLU
    out = jnp.dot(h, w2_ref[...], preferred_element_type=jnp.float32)
    o_ref[...] = (out + b2_ref[...]).astype(o_ref.dtype)


# ----------------------------------------------------------------------------
# Helpers
# ----------------------------------------------------------------------------
def _round_up(x, m):
    return ((x + m - 1) // m) * m


def _largest_aligned_divisor(k_rows, cap_rows):
    """Largest multiple of 128 that divides k_rows (a multiple of 128), <= cap_rows."""
    units = k_rows // 128
    cap_units = max(1, cap_rows // 128)
    best = 1
    d = 1
    while d * d <= units:
        if units % d == 0:
            lo, hi = d, units // d
            if lo <= cap_units and lo > best:
                best = lo
            if hi <= cap_units and hi > best:
                best = hi
        d += 1
    return best * 128


def _vmem_capacity_bytes():
    try:
        return int(pltpu.get_tpu_info().vmem_capacity_bytes)
    except Exception:
        return 64 * 1024 * 1024        # conservative: v7x per-core VMEM


# ----------------------------------------------------------------------------
# Parameter preparation (done ONCE, outside the forward)
# ----------------------------------------------------------------------------
def prepare_fcn_params(w1, b1, w2, b2, *, w1_dtype=jnp.bfloat16):
    """Pad W1's K axis to a 256-multiple (keeps the stream 2-way splittable and
    128-aligned) and cast it to the streaming dtype.  Zero-padded rows
    contribute nothing to x @ W1.  This is the per-parameter cost the forward
    must not pay on every call."""
    K, hidden = w1.shape
    K_pad = _round_up(K, 256)
    if K_pad != K:
        w1 = jnp.pad(w1, ((0, K_pad - K), (0, 0)))
    return {
        "w1": w1.astype(w1_dtype),
        "b1": b1.reshape(1, hidden).astype(jnp.float32),
        "w2": w2.astype(jnp.float32),
        "b2": b2.reshape(1, -1).astype(jnp.float32),
        "K": K,
        "K_pad": K_pad,
    }


# ----------------------------------------------------------------------------
# Forward
# ----------------------------------------------------------------------------
def fcn_classifier_forward(x_nchw, params, *, core_splits=2, tk_max=None):
    """x_nchw: (B, C, H, W).  params from prepare_fcn_params."""
    w1, b1, w2, b2 = params["w1"], params["b1"], params["w2"], params["b2"]
    K, K_pad = params["K"], params["K_pad"]
    B = x_nchw.shape[0]
    hidden = w1.shape[1]
    num_classes = w2.shape[1]

    x = x_nchw.reshape(B, -1)                       # flatten: (B, K)
    if x.shape[1] != K:
        raise ValueError(f"expected flattened input size {K}, got {x.shape[1]}")
    x = x.astype(w1.dtype)                          # stream x in the same dtype as W1
    if K_pad != K:
        x = jnp.pad(x, ((0, 0), (0, K_pad - K)))    # x is small; pad per call is fine

    # --- core split (uses both v7x TensorCores; ~free on 1-TC chips) -------
    S = core_splits if (core_splits >= 1 and (K_pad // 128) % core_splits == 0) else 1
    k_per_split = K_pad // S

    # --- generation-aware K tile -------------------------------------------
    vmem_cap = _vmem_capacity_bytes()
    vmem_limit = min(vmem_cap * 3 // 4, 100 * 1024 * 1024)   # ~96 MiB on v5e/v6e, 48 MiB on v7x
    budget = max(vmem_limit - (4 << 20), 2 << 20)             # headroom for acc/out/etc.
    w_item = jnp.dtype(w1.dtype).itemsize
    # bytes per K row: double-buffered W1 tile (minor dim lane-padded to 128)
    #                + double-buffered x tile (sublane-padded batch).
    per_row = 2 * max(128, _round_up(hidden, 128)) * w_item + 2 * _round_up(B, 32) * w_item
    tk_cap = max(128, min(65536, budget // per_row))
    if tk_max is not None:
        tk_cap = max(128, min(tk_cap, tk_max))
    tk = _largest_aligned_divisor(k_per_split, tk_cap)
    ks = k_per_split // tk                      # K steps per split
    grid = (S, ks)

    cost = pl.CostEstimate(
        flops=int(2 * B * K_pad * hidden),
        transcendentals=0,
        bytes_accessed=int(w_item * (B * K_pad + K_pad * hidden) + 4 * S * B * hidden),
    )

    # --- kernel 1: streamed fc1 (x @ W1), per-split partials ----------------
    partial = pl.pallas_call(
        _fc1_stream_kernel,
        out_shape=jax.ShapeDtypeStruct((S, B, hidden), jnp.float32),
        grid_spec=pltpu.PrefetchScalarGridSpec(
            num_scalar_prefetch=0,
            grid=grid,
            in_specs=[
                # x: streamed (B, tk) tiles (not resident).
                pl.BlockSpec((B, tk), lambda s, k: (0, s * ks + k)),
                # W1: (tk, hidden) bf16 tiles -- the dominant HBM stream.
                pl.BlockSpec((tk, hidden), lambda s, k: (s * ks + k, 0)),
            ],
            out_specs=pl.BlockSpec((1, B, hidden), lambda s, k: (s, 0, 0)),
        ),
        compiler_params=pltpu.CompilerParams(
            dimension_semantics=("parallel", "arbitrary"),
            vmem_limit_bytes=int(vmem_limit),
        ),
        cost_estimate=cost,
    )(x, w1)

    # --- kernel 2: combine partials + bias1 + ReLU + fc2 + bias2 (tiny) -----
    out = pl.pallas_call(
        _fc_epilogue_kernel,
        out_shape=jax.ShapeDtypeStruct((B, num_classes), jnp.float32),
        grid_spec=pltpu.PrefetchScalarGridSpec(
            num_scalar_prefetch=0,
            grid=(1,),
            in_specs=[
                pl.BlockSpec((S, B, hidden), lambda i: (0, 0, 0)),
                pl.BlockSpec((1, hidden), lambda i: (0, 0)),
                pl.BlockSpec((hidden, num_classes), lambda i: (0, 0)),
                pl.BlockSpec((1, num_classes), lambda i: (0, 0)),
            ],
            out_specs=pl.BlockSpec((B, num_classes), lambda i: (0, 0)),
        ),
    )(partial, b1, w2, b2)
    return out


# ----------------------------------------------------------------------------
# Reference + test
# ----------------------------------------------------------------------------
def _reference(x_nchw, w1, b1, w2, b2):
    x = x_nchw.reshape(x_nchw.shape[0], -1)
    return jnp.maximum(x @ w1 + b1, 0.0) @ w2 + b2


if __name__ == "__main__":
    # Small shapes consistent with the module's forward:
    # batch=2, single-channel 30x30 images -> input_size = 900 (not a multiple
    # of 128, exercising the one-time K padding); hidden=64, 11 classes.
    B, C, H, W = 2, 1, 30, 30
    input_size = C * H * W          # 900
    hidden_size = 64
    num_classes = 11

    key = jax.random.PRNGKey(0)
    kx, k1, kb1, k2, kb2 = jax.random.split(key, 5)

    x = jax.random.normal(kx, (B, C, H, W), dtype=jnp.float32)

    bound1 = 1.0 / (input_size ** 0.5)
    w1 = jax.random.uniform(k1, (input_size, hidden_size), jnp.float32, -bound1, bound1)
    b1 = jax.random.uniform(kb1, (hidden_size,), jnp.float32, -bound1, bound1)
    bound2 = 1.0 / (hidden_size ** 0.5)
    w2 = jax.random.uniform(k2, (hidden_size, num_classes), jnp.float32, -bound2, bound2)
    b2 = jax.random.uniform(kb2, (num_classes,), jnp.float32, -bound2, bound2)

    ref_f32 = _reference(x, w1, b1, w2, b2)
    # Reference with the same bf16 rounding the streaming path applies to x / W1.
    xq = x.reshape(B, -1).astype(jnp.bfloat16).astype(jnp.float32)
    w1q = w1.astype(jnp.bfloat16).astype(jnp.float32)
    ref_q = jnp.maximum(xq @ w1q + b1, 0.0) @ w2 + b2

    # Default fast path: bf16 W1 stream, auto K tile, 2-way core split.
    params_bf16 = prepare_fcn_params(w1, b1, w2, b2)             # w1_dtype=bf16
    out = jax.block_until_ready(fcn_classifier_forward(x, params_bf16))
    assert out.shape == (B, num_classes)
    assert jnp.allclose(out, ref_q, atol=1e-3, rtol=1e-3), "mismatch (bf16 path)"

    # Force a multi-step K stream (grid = (2, 4)) to exercise the accumulation loop.
    out_multi = jax.block_until_ready(
        fcn_classifier_forward(x, params_bf16, tk_max=128))
    assert jnp.allclose(out_multi, ref_q, atol=1e-3, rtol=1e-3), "mismatch (multi-tile)"

    # Exact-f32 path (no weight quantization), single split.
    params_f32 = prepare_fcn_params(w1, b1, w2, b2, w1_dtype=jnp.float32)
    out_f32 = jax.block_until_ready(
        fcn_classifier_forward(x, params_f32, core_splits=1))
    assert jnp.allclose(out_f32, ref_f32, atol=1e-4, rtol=1e-4), "mismatch (f32 path)"

    print("KERNEL_OK")
</pallas_src>

<mosaic_0001>
module attributes {stable_mosaic.version = 11 : i64} {
  func.func @_fc1_stream_kernel(%arg0: i32, %arg1: i32, %arg2: memref<2x512xbf16, #tpu.memory_space<vmem>>, %arg3: memref<512x64xbf16, #tpu.memory_space<vmem>>, %arg4: memref<1x2x64xf32, #tpu.memory_space<vmem>>) attributes {dimension_semantics = [#tpu.dimension_semantics<parallel>, #tpu.dimension_semantics<arbitrary>], iteration_bounds = array<i64: 2, 1>, scalar_prefetch = 0 : i64, scratch_operands = 0 : i64, tpu.core_type = #tpu.core_type<tc>, window_params = [{transform_indices = @transform_0, window_bounds = array<i64: 2, 512>}, {transform_indices = @transform_1, window_bounds = array<i64: 512, 64>}, {transform_indices = @transform_2, window_bounds = array<i64: 1, 2, 64>}]} {
    %c0_i32 = arith.constant 0 : i32
    %0 = arith.cmpi eq, %arg1, %c0_i32 : i32
    %1 = arith.extui %0 : i1 to i32
    %c0_i32_0 = arith.constant 0 : i32
    %2 = arith.cmpi ne, %1, %c0_i32_0 : i32
    scf.if %2 {
      %cst_10 = arith.constant 0.000000e+00 : f32
      %10 = vector.broadcast %cst_10 : f32 to vector<1x2x64xf32>
      %c0_11 = arith.constant 0 : index
      %c0_12 = arith.constant 0 : index
      %c0_13 = arith.constant 0 : index
      %11 = vector.load %arg4[%c0_11, %c0_12, %c0_13] : memref<1x2x64xf32, #tpu.memory_space<vmem>>, vector<1x2x64xf32>
      tpu.vector_store %arg4[%c0_11, %c0_12, %c0_13], %10 {strides = array<i32>} : memref<1x2x64xf32, #tpu.memory_space<vmem>>, vector<1x2x64xf32>,
    } else {
    }
    %c0 = arith.constant 0 : index
    %c0_1 = arith.constant 0 : index
    %c0_2 = arith.constant 0 : index
    %3 = vector.load %arg4[%c0, %c0_1, %c0_2] : memref<1x2x64xf32, #tpu.memory_space<vmem>>, vector<1x2x64xf32>
    %c0_3 = arith.constant 0 : index
    %c0_4 = arith.constant 0 : index
    %4 = vector.load %arg2[%c0_3, %c0_4] : memref<2x512xbf16, #tpu.memory_space<vmem>>, vector<2x512xbf16>
    %c0_5 = arith.constant 0 : index
    %c0_6 = arith.constant 0 : index
    %5 = vector.load %arg3[%c0_5, %c0_6] : memref<512x64xbf16, #tpu.memory_space<vmem>>, vector<512x64xbf16>
    %cst = arith.constant dense<0.000000e+00> : vector<2x64xf32>
    %6 = tpu.matmul %4, %5, %cst {dimension_numbers = #tpu.dot_dimension_numbers<[1], [0], [0], [1], [0, 0, 1, 1], [], []>} : vector<2x512xbf16>, vector<512x64xbf16>, vector<2x64xf32> -> vector<2x64xf32>
    %7 = vector.shape_cast %6 : vector<2x64xf32> to vector<1x2x64xf32>
    %8 = arith.addf %3, %7 : vector<1x2x64xf32>
    %c0_7 = arith.constant 0 : index
    %c0_8 = arith.constant 0 : index
    %c0_9 = arith.constant 0 : index
    %9 = vector.load %arg4[%c0_7, %c0_8, %c0_9] : memref<1x2x64xf32, #tpu.memory_space<vmem>>, vector<1x2x64xf32>
    tpu.vector_store %arg4[%c0_7, %c0_8, %c0_9], %8 {strides = array<i32>} : memref<1x2x64xf32, #tpu.memory_space<vmem>>, vector<1x2x64xf32>,
    return
  }
  func.func @transform_0(%arg0: i32, %arg1: i32) -> (i32, i32) {
    %c1_i32 = arith.constant 1 : i32
    %0 = arith.muli %arg0, %c1_i32 : i32
    %1 = arith.addi %0, %arg1 : i32
    %c0_i32 = arith.constant 0 : i32
    %c0_i32_0 = arith.constant 0 : i32
    return %c0_i32, %1 : i32, i32
  }
  func.func @transform_1(%arg0: i32, %arg1: i32) -> (i32, i32) {
    %c1_i32 = arith.constant 1 : i32
    %0 = arith.muli %arg0, %c1_i32 : i32
    %1 = arith.addi %0, %arg1 : i32
    %c0_i32 = arith.constant 0 : i32
    %c0_i32_0 = arith.constant 0 : i32
    return %1, %c0_i32 : i32, i32
  }
  func.func @transform_2(%arg0: i32, %arg1: i32) -> (i32, i32, i32) {
    %c0_i32 = arith.constant 0 : i32
    %c0_i32_0 = arith.constant 0 : i32
    %c0_i32_1 = arith.constant 0 : i32
    return %arg0, %c0_i32, %c0_i32_0 : i32, i32, i32
  }
}

</mosaic_0001>

<llo_original>
// kernel: tpu_custom_call.1
$region0: #{tpu_custom_call.1}
  #allocation0 [shape = 'u32[]', space=smem, size = 0x4, offset = 0x4, fixed_abs, tag = 'smem constant byte address 0x4 - core index']
  #allocation1 [shape = 'u32[144,128]{1,0:T(1,128)}', space=vmem, size = 0x12000, scoped, tag = 'internal scratch']
  %s0 = inlined_call_operand.vmem [shape: bf16[2,1024], index: 0, kind: input, shape index: {}]
  %s1 = inlined_call_operand.vmem [shape: bf16[1024,64], index: 1, kind: input, shape index: {}]
  %s2 = inlined_call_operand.hbm [shape: f32[2,2,64], index: 2, kind: output, shape index: {}]
  %s3 = sld [smem:[#allocation0]]
  $region45: #{tpu_custom_call.1} parent=0
    _
  %s5 = ssub.s32 1, %s3
  %s6 = scalar_select 0, %s5, %s3
  $region1: #{tpu_custom_call.1} parent=0
    #allocation2 [shape = 'u8[2048]{0}', space=vmem, size = 0x800, scoped, tag = 'output window, operand 0']
    #allocation3 [shape = 's32[2]{0}', space=sflag, size = 0x8, scoped, tag = 'scoped memory for tpu_custom_call.1']
    %7 = vsyncpa [#allocation3], 0
    %s8 = scalar_lea.sflag [#allocation3], 1
    %9 = vsyncpa %s8, 0
    loop: start=0, step=1, limit=4
    $region2: #{tpu_custom_call.1} parent=1 // loop_pre_header
      _
    $region3: #{tpu_custom_call.1} parent=1 // loop_header
      %s11 = sphi 0, %s15
      %p12 = scmp.ge.s32.totalorder %s11, 4
      %s18 = sphi 0, %s30
      %s19 = sphi 0, %s26
      %s20 = sphi 0, %s18
      %s21 = sphi 0, %s19
      %s22 = sphi 0, %s20
      %s23 = sphi 0, %s21
      %s35 = sphi 0, %s37
      %s38 = sphi 0, %s35
      %s39 = sphi 0, %s38
      %s55 = sphi 0, %s39
      %s63 = sphi 0, %s65
      %s66 = sphi 0, %s63
      %s67 = sphi 0, %s66
      %s83 = sphi 0, %s67
      %s89 = sphi 0, %s91
      %s92 = sphi 0, %s89
      %s93 = sphi 0, %s92
      %s109 = sphi 0, %s93
    $region4: #{tpu_custom_call.1} parent=1 // loop_header_branch
      %14 = sbr.rel (%p12) target = $region8
    $region5: #{tpu_custom_call.1} parent=1 // loop_body
      %s16 = ssub.s32 %s11, 1
      %s17 = ssub.s32 %s11, 2
      %s24 = sadd.s32 1, %s19
      %p25 = scmp.ge.s32.totalorder %s24, 1
      %s26 = scalar_select %p25, 0, %s24
      %s27 = sadd.s32 1, %s18
      %s28 = scalar_select %p25, %s27, %s18
      %p29 = scmp.ge.s32.totalorder %s28, 2
      %s30 = scalar_select %p29, 0, %s28
      %s31 = sadd.s32 %s18, %s19
      %s32 = sadd.s32 %s30, %s26
      %s33 = ssub.s32 %s31, %s32
      %p34 = scmp.eq.s32.totalorder %s33, 0
      %s36 = sadd.s32 %s35, 1
      %s37 = scalar_select %p34, %s35, %s36
      %p40 = pneg %p34
      %p41 = scmp.eq.s32.totalorder %s11, 1
      %p42 = por %p40, %p41
      %p43 = scmp.ne.s32.totalorder %s35, %s38
      %p44 = scmp.eq.s32.totalorder %s11, 0
      %p45 = por %p43, %p44
      %p46 = scmp.ne.s32.totalorder %s35, %s38
      %p47 = scmp.eq.s32.totalorder %s16, 1
      %p48 = por %p46, %p47
      %p49 = scmp.ne.s32.totalorder %s38, %s39
      %p50 = scmp.eq.s32.totalorder %s16, 0
      %p51 = por %p49, %p50
      %p52 = scmp.ne.s32.totalorder %s38, %s39
      %p53 = scmp.eq.s32.totalorder %s17, 1
      %p54 = por %p52, %p53
      %p56 = scmp.ne.s32.totalorder %s39, %s55
      %p57 = scmp.eq.s32.totalorder %s17, 0
      %p58 = por %p56, %p57
      %s59 = sadd.s32 %s18, %s19
      %s60 = sadd.s32 %s30, %s26
      %s61 = ssub.s32 %s59, %s60
      %p62 = scmp.eq.s32.totalorder %s61, 0
      %s64 = sadd.s32 %s63, 1
      %s65 = scalar_select %p62, %s63, %s64
      %p68 = pneg %p62
      %p69 = scmp.eq.s32.totalorder %s11, 1
      %p70 = por %p68, %p69
      %p71 = scmp.ne.s32.totalorder %s63, %s66
      %p72 = scmp.eq.s32.totalorder %s11, 0
      %p73 = por %p71, %p72
      %p74 = scmp.ne.s32.totalorder %s63, %s66
      %p75 = scmp.eq.s32.totalorder %s16, 1
      %p76 = por %p74, %p75
      %p77 = scmp.ne.s32.totalorder %s66, %s67
      %p78 = scmp.eq.s32.totalorder %s16, 0
      %p79 = por %p77, %p78
      %p80 = scmp.ne.s32.totalorder %s66, %s67
      %p81 = scmp.eq.s32.totalorder %s17, 1
      %p82 = por %p80, %p81
      %p84 = scmp.ne.s32.totalorder %s67, %s83
      %p85 = scmp.eq.s32.totalorder %s17, 0
      %p86 = por %p84, %p85
      %s87 = ssub.s32 %s18, %s30
      %p88 = scmp.eq.s32.totalorder %s87, 0
      %s90 = sadd.s32 %s89, 1
      %s91 = scalar_select %p88, %s89, %s90
      %p94 = pneg %p88
      %p95 = scmp.eq.s32.totalorder %s11, 1
      %p96 = por %p94, %p95
      %p97 = scmp.ne.s32.totalorder %s89, %s92
      %p98 = scmp.eq.s32.totalorder %s11, 0
      %p99 = por %p97, %p98
      %p100 = scmp.ne.s32.totalorder %s89, %s92
      %p101 = scmp.eq.s32.totalorder %s16, 1
      %p102 = por %p100, %p101
      %p103 = scmp.ne.s32.totalorder %s92, %s93
      %p104 = scmp.eq.s32.totalorder %s16, 0
      %p105 = por %p103, %p104
      %p106 = scmp.ne.s32.totalorder %s92, %s93
      %p107 = scmp.eq.s32.totalorder %s17, 1
      %p108 = por %p106, %p107
      %p110 = scmp.ne.s32.totalorder %s93, %s109
      %p111 = scmp.eq.s32.totalorder %s17, 0
      %p112 = por %p110, %p111
      %p113 = scmp.le.s32.totalorder 1, %s11
      %p114 = scmp.lt.s32.totalorder %s11, 3
      %p115 = pnand %p113, %p114
      %p116 = pneg %p115
      // Predicated region
      $region9: #{tpu_custom_call.1} parent=5 // pred_check
        _
      $region10: #{tpu_custom_call.1} parent=5 // pred_check_branch
        %118 = sbr.rel (%p115) target = $region12
      $region11: #{tpu_custom_call.1} parent=5 // pred_region
        %s119 = ssub.s32 %s11, 1
      $region12: #{tpu_custom_call.1} parent=5 // pred_fallthru
        _
      %p120 = scmp.lt.s32.totalorder %s11, 2
      // Predicated region
      $region13: #{tpu_custom_call.1} parent=5 // pred_check
        %p121 = pneg %p120
      $region14: #{tpu_custom_call.1} parent=5 // pred_check_branch
        %123 = sbr.rel (%p121) target = $region16
      $region15: #{tpu_custom_call.1} parent=5 // pred_region
        // Predicated region
        $region17: #{tpu_custom_call.1} parent=15 // pred_check
          %p124 = pneg %p45
        $region18: #{tpu_custom_call.1} parent=15 // pred_check_branch
          %126 = sbr.rel (%p124) target = $region20
        $region19: #{tpu_custom_call.1} parent=15 // pred_region
          %s127 = sadd.s32 %s18, %s19
          %s128 = smul.u32 4, %s127
          %p129 = scmp.lt.s32.totalorder %s128, 7
          %s130 = scalar_select %p129, %s128, 7
          %s131 = scalar_lea.vmem %s0, %s130
          %s132 = sadd.s32 %s18, %s19
          %s133 = smul.u32 4, %s132
        $region20: #{tpu_custom_call.1} parent=15 // pred_fallthru
          _
        // Predicated region
        $region21: #{tpu_custom_call.1} parent=15 // pred_check
          %p134 = pneg %p73
        $region22: #{tpu_custom_call.1} parent=15 // pred_check_branch
          %136 = sbr.rel (%p134) target = $region24
        $region23: #{tpu_custom_call.1} parent=15 // pred_region
          %s137 = sadd.s32 %s18, %s19
          %s138 = smul.u32 64, %s137
          %p139 = scmp.lt.s32.totalorder %s138, 127
          %s140 = scalar_select %p139, %s138, 127
          %s141 = smul.addr %s140, 4
          %s142 = scalar_lea.vmem %s1, %s141
          %s143 = sadd.s32 %s18, %s19
          %s144 = smul.u32 64, %s143
        $region24: #{tpu_custom_call.1} parent=15 // pred_fallthru
          _
      $region16: #{tpu_custom_call.1} parent=5 // pred_fallthru
        _
      %p145 = scmp.le.s32.totalorder 1, %s11
      %p146 = scmp.lt.s32.totalorder %s11, 3
      %p147 = pnand %p145, %p146
      %p148 = pneg %p147
      // Predicated region
      $region25: #{tpu_custom_call.1} parent=5 // pred_check
        _
      $region26: #{tpu_custom_call.1} parent=5 // pred_check_branch
        %150 = sbr.rel (%p147) target = $region28
      $region27: #{tpu_custom_call.1} parent=5 // pred_region
        %s151 = ssub.s32 %s11, 1
        %s152 = sadd.s32 %s20, %s21
        %s153 = smul.u32 4, %s152
        %p154 = scmp.lt.s32.totalorder %s153, 7
        %s155 = scalar_select %p154, %s153, 7
        %s156 = scalar_lea.vmem %s0, %s155
        %p157 = pneg %p51
        %p158 = pneg %p48
        %s159 = sadd.s32 %s20, %s21
        %s160 = smul.u32 64, %s159
        %p161 = scmp.lt.s32.totalorder %s160, 127
        %s162 = scalar_select %p161, %s160, 127
        %s163 = smul.addr %s162, 4
        %s164 = scalar_lea.vmem %s1, %s163
        %p165 = pneg %p79
        %p166 = pneg %p76
        %p167 = pneg %p105
        %p168 = pneg %p102
        %s169 = sand.u32 %s92, 1
        %s170 = scalar_lea.sflag [#allocation3], %s169
        %s171 = sand.u32 %s92, 1
        %s172 = smul.addr %s171, 2
        %s173 = scalar_lea.vmem [#allocation2], %s172
        %s174 = sadd.s32 %s20, %s21
        %s175 = smul.u32 4, %s174
        %p176 = scmp.lt.s32.totalorder %s175, 7
        %s177 = scalar_select %p176, %s175, 7
        %s178 = scalar_lea.vmem %s0, %s177
        %s179 = sadd.s32 %s20, %s21
        %s180 = smul.u32 4, %s179
        %s181 = sadd.s32 %s20, %s21
        %s182 = smul.u32 64, %s181
        %p183 = scmp.lt.s32.totalorder %s182, 127
        %s184 = scalar_select %p183, %s182, 127
        %s185 = smul.addr %s184, 4
        %s186 = scalar_lea.vmem %s1, %s185
        %s187 = sadd.s32 %s20, %s21
        %s188 = smul.u32 64, %s187
        %p190 = scmp.eq.s32.totalorder %s21, 0
        // Predicated region
        $region29: #{tpu_custom_call.1} parent=27 // pred_check
          %p191 = pneg %p190
        $region30: #{tpu_custom_call.1} parent=27 // pred_check_branch
          %193 = sbr.rel (%p191) target = $region32
        $region31: #{tpu_custom_call.1} parent=27 // pred_region
          %vm194 = vcmask 517120
          %195 = vst.msk [vmem:[%s173] sm:$0x3] %vm194, 0.0
        $region32: #{tpu_custom_call.1} parent=27 // pred_fallthru
          _
        %v196 = vld [vmem:[%s173] sm:$0x3]
        %v197 = vld [vmem:[%s178] sm:$0xf]
        %v198 = vld [vmem:[%s186] sm:$0xf]
        %v199 = vld [vmem:[%s186 + $0x4] sm:$0xf]
        %v200 = vld [vmem:[%s186 + $0x8] sm:$0xf]
        %v201 = vld [vmem:[%s186 + $0xc] sm:$0xf]
        %v202 = vld [vmem:[%s186 + $0x10] sm:$0xf]
        %v203 = vld [vmem:[%s186 + $0x14] sm:$0xf]
        %v204 = vld [vmem:[%s186 + $0x18] sm:$0xf]
        %v205 = vld [vmem:[%s186 + $0x1c] sm:$0xf]
        %v206 = vld [vmem:[%s186 + $0x20] sm:$0xf]
        %v207 = vld [vmem:[%s186 + $0x24] sm:$0xf]
        %v208 = vld [vmem:[%s186 + $0x28] sm:$0xf]
        %v209 = vld [vmem:[%s186 + $0x2c] sm:$0xf]
        %v210 = vld [vmem:[%s186 + $0x30] sm:$0xf]
        %v211 = vld [vmem:[%s186 + $0x34] sm:$0xf]
        %v212 = vld [vmem:[%s186 + $0x38] sm:$0xf]
        %v213 = vld [vmem:[%s186 + $0x3c] sm:$0xf]
        %v214 = vld [vmem:[%s186 + $0x40] sm:$0xf]
        %v215 = vld [vmem:[%s186 + $0x44] sm:$0xf]
        %v216 = vld [vmem:[%s186 + $0x48] sm:$0xf]
        %v217 = vld [vmem:[%s186 + $0x4c] sm:$0xf]
        %v218 = vld [vmem:[%s186 + $0x50] sm:$0xf]
        %v219 = vld [vmem:[%s186 + $0x54] sm:$0xf]
        %v220 = vld [vmem:[%s186 + $0x58] sm:$0xf]
        %v221 = vld [vmem:[%s186 + $0x5c] sm:$0xf]
        %v222 = vld [vmem:[%s186 + $0x60] sm:$0xf]
        %v223 = vld [vmem:[%s186 + $0x64] sm:$0xf]
        %v224 = vld [vmem:[%s186 + $0x68] sm:$0xf]
        %v225 = vld [vmem:[%s186 + $0x6c] sm:$0xf]
        %v226 = vld [vmem:[%s186 + $0x70] sm:$0xf]
        %v227 = vld [vmem:[%s186 + $0x74] sm:$0xf]
        %v228 = vld [vmem:[%s186 + $0x78] sm:$0xf]
        %v229 = vld [vmem:[%s186 + $0x7c] sm:$0xf]
        %v230 = vld [vmem:[%s186 + $0x80] sm:$0xf]
        %v231 = vld [vmem:[%s186 + $0x84] sm:$0xf]
        %v232 = vld [vmem:[%s186 + $0x88] sm:$0xf]
        %v233 = vld [vmem:[%s186 + $0x8c] sm:$0xf]
        %v234 = vld [vmem:[%s186 + $0x90] sm:$0xf]
        %v235 = vld [vmem:[%s186 + $0x94] sm:$0xf]
        %v236 = vld [vmem:[%s186 + $0x98] sm:$0xf]
        %v237 = vld [vmem:[%s186 + $0x9c] sm:$0xf]
        %v238 = vld [vmem:[%s186 + $0xa0] sm:$0xf]
        %v239 = vld [vmem:[%s186 + $0xa4] sm:$0xf]
        %v240 = vld [vmem:[%s186 + $0xa8] sm:$0xf]
        %v241 = vld [vmem:[%s186 + $0xac] sm:$0xf]
        %v242 = vld [vmem:[%s186 + $0xb0] sm:$0xf]
        %v243 = vld [vmem:[%s186 + $0xb4] sm:$0xf]
        %v244 = vld [vmem:[%s186 + $0xb8] sm:$0xf]
        %v245 = vld [vmem:[%s186 + $0xbc] sm:$0xf]
        %v246 = vld [vmem:[%s186 + $0xc0] sm:$0xf]
        %v247 = vld [vmem:[%s186 + $0xc4] sm:$0xf]
        %v248 = vld [vmem:[%s186 + $0xc8] sm:$0xf]
        %v249 = vld [vmem:[%s186 + $0xcc] sm:$0xf]
        %v250 = vld [vmem:[%s186 + $0xd0] sm:$0xf]
        %v251 = vld [vmem:[%s186 + $0xd4] sm:$0xf]
        %v252 = vld [vmem:[%s186 + $0xd8] sm:$0xf]
        %v253 = vld [vmem:[%s186 + $0xdc] sm:$0xf]
        %v254 = vld [vmem:[%s186 + $0xe0] sm:$0xf]
        %v255 = vld [vmem:[%s186 + $0xe4] sm:$0xf]
        %v256 = vld [vmem:[%s186 + $0xe8] sm:$0xf]
        %v257 = vld [vmem:[%s186 + $0xec] sm:$0xf]
        %v258 = vld [vmem:[%s186 + $0xf0] sm:$0xf]
        %v259 = vld [vmem:[%s186 + $0xf4] sm:$0xf]
        %v260 = vld [vmem:[%s186 + $0xf8] sm:$0xf]
        %v261 = vld [vmem:[%s186 + $0xfc] sm:$0xf]
        %v264 = vunpack.c.l.s4 1966171168
        %v265 = vunpack.c.0.s8 %v264
        %v266 = vlaneseq
        %v267 = vshrl.u32 %v266, 7
        %v268 = vsub.s32 %v265, %v267
        %v269 = vrot.slane %v197, %v268
        %v270 = vcombine.high %v269, %v269
        %v272 = vunpack.c.l.s4 1966171168
        %v273 = vunpack.c.0.s8 %v272
        %v274 = vlaneseq
        %v275 = vshrl.u32 %v274, 7
        %v276 = vsub.s32 %v273, %v275
        %v277 = vrot.slane %v269, %v276
        %v279 = vunpack.c.l.s4 1966171168
        %v280 = vunpack.c.0.s8 %v279
        %v281 = vlaneseq
        %v282 = vshrl.u32 %v281, 7
        %v283 = vsub.s32 %v280, %v282
        %v284 = vrot.slane %v270, %v283
        %v285 = vcombine.high %v277, %v277
        %v286 = vcombine.high %v284, %v284
        %v355 = vunpack.c.l.b16 %v198
        %v356 = vunpack.c.l.b16 %v199
        %v357 = vunpack.c.l.b16 %v200
        %v358 = vunpack.c.l.b16 %v201
        %v359 = vunpack.c.l.b16 %v202
        %v360 = vunpack.c.l.b16 %v203
        %v361 = vunpack.c.l.b16 %v204
        %v362 = vunpack.c.l.b16 %v205
        %v363 = vunpack.c.l.b16 %v206
        %v364 = vunpack.c.l.b16 %v207
        %v365 = vunpack.c.l.b16 %v208
        %v366 = vunpack.c.l.b16 %v209
        %v367 = vunpack.c.l.b16 %v210
        %v368 = vunpack.c.l.b16 %v211
        %v369 = vunpack.c.l.b16 %v212
        %v370 = vunpack.c.l.b16 %v213
        %v371 = vunpack.c.l.b16 %v214
        %v372 = vunpack.c.l.b16 %v215
        %v373 = vunpack.c.l.b16 %v216
        %v374 = vunpack.c.l.b16 %v217
        %v375 = vunpack.c.l.b16 %v218
        %v376 = vunpack.c.l.b16 %v219
        %v377 = vunpack.c.l.b16 %v220
        %v378 = vunpack.c.l.b16 %v221
        %v379 = vunpack.c.l.b16 %v222
        %v380 = vunpack.c.l.b16 %v223
        %v381 = vunpack.c.l.b16 %v224
        %v382 = vunpack.c.l.b16 %v225
        %v383 = vunpack.c.l.b16 %v226
        %v384 = vunpack.c.l.b16 %v227
        %v385 = vunpack.c.l.b16 %v228
        %v386 = vunpack.c.l.b16 %v229
        %v387 = vunpack.c.l.b16 %v230
        %v388 = vunpack.c.l.b16 %v231
        %v389 = vunpack.c.l.b16 %v232
        %v390 = vunpack.c.l.b16 %v233
        %v391 = vunpack.c.l.b16 %v234
        %v392 = vunpack.c.l.b16 %v235
        %v393 = vunpack.c.l.b16 %v236
        %v394 = vunpack.c.l.b16 %v237
        %v395 = vunpack.c.l.b16 %v238
        %v396 = vunpack.c.l.b16 %v239
        %v397 = vunpack.c.l.b16 %v240
        %v398 = vunpack.c.l.b16 %v241
        %v399 = vunpack.c.l.b16 %v242
        %v400 = vunpack.c.l.b16 %v243
        %v401 = vunpack.c.l.b16 %v244
        %v402 = vunpack.c.l.b16 %v245
        %v403 = vunpack.c.l.b16 %v246
        %v404 = vunpack.c.l.b16 %v247
        %v405 = vunpack.c.l.b16 %v248
        %v406 = vunpack.c.l.b16 %v249
        %v407 = vunpack.c.l.b16 %v250
        %v408 = vunpack.c.l.b16 %v251
        %v409 = vunpack.c.l.b16 %v252
        %v410 = vunpack.c.l.b16 %v253
        %v411 = vunpack.c.l.b16 %v254
        %v412 = vunpack.c.l.b16 %v255
        %v413 = vunpack.c.l.b16 %v256
        %v414 = vunpack.c.l.b16 %v257
        %v415 = vunpack.c.l.b16 %v258
        %v416 = vunpack.c.l.b16 %v259
        %v417 = vunpack.c.l.b16 %v260
        %v418 = vunpack.c.l.b16 %v261
        %v419 = vpack.c.b16 %v356, %v355
        %v420 = vpack.c.b16 %v358, %v357
        %v421 = vpack.c.b16 %v360, %v359
        %v422 = vpack.c.b16 %v362, %v361
        %v423 = vpack.c.b16 %v364, %v363
        %v424 = vpack.c.b16 %v366, %v365
        %v425 = vpack.c.b16 %v368, %v367
        %v426 = vpack.c.b16 %v370, %v369
        %v427 = vpack.c.b16 %v372, %v371
        %v428 = vpack.c.b16 %v374, %v373
        %v429 = vpack.c.b16 %v376, %v375
        %v430 = vpack.c.b16 %v378, %v377
        %v431 = vpack.c.b16 %v380, %v379
        %v432 = vpack.c.b16 %v382, %v381
        %v433 = vpack.c.b16 %v384, %v383
        %v434 = vpack.c.b16 %v386, %v385
        %v435 = vpack.c.b16 %v388, %v387
        %v436 = vpack.c.b16 %v390, %v389
        %v437 = vpack.c.b16 %v392, %v391
        %v438 = vpack.c.b16 %v394, %v393
        %v439 = vpack.c.b16 %v396, %v395
        %v440 = vpack.c.b16 %v398, %v397
        %v441 = vpack.c.b16 %v400, %v399
        %v442 = vpack.c.b16 %v402, %v401
        %v443 = vpack.c.b16 %v404, %v403
        %v444 = vpack.c.b16 %v406, %v405
        %v445 = vpack.c.b16 %v408, %v407
        %v446 = vpack.c.b16 %v410, %v409
        %v447 = vpack.c.b16 %v412, %v411
        %v448 = vpack.c.b16 %v414, %v413
        %v449 = vpack.c.b16 %v416, %v415
        %v450 = vpack.c.b16 %v418, %v417
        %483 = vmatprep.subr.bf16.mxu0 0
        %484 = vmatpush1.bf16.msra.mxu0 %v426
        %485 = vmatprep.subr.bf16.mxu0 0
        %486 = vmatpush1.bf16.msra.mxu0 %v425
        %487 = vmatprep.subr.bf16.mxu0 0
        %488 = vmatpush1.bf16.msra.mxu0 %v424
        %489 = vmatprep.subr.bf16.mxu0 0
        %490 = vmatpush1.bf16.msra.mxu0 %v423
        %491 = vmatprep.subr.bf16.mxu0 0
        %492 = vmatpush1.bf16.msra.mxu0 %v422
        %493 = vmatprep.subr.bf16.mxu0 0
        %494 = vmatpush1.bf16.msra.mxu0 %v421
        %495 = vmatprep.subr.bf16.mxu0 0
        %496 = vmatpush1.bf16.msra.mxu0 %v420
        %497 = vmatprep.subr.bf16.mxu0 0
        %498 = vmatpush1.bf16.msra.mxu0 %v419
        %499 = vmatprep.subr.bf16.mxu0 0
        %500 = vmatpush2.bf16.msra.mxu0 %v434
        %501 = vmatprep.subr.bf16.mxu0 0
        %502 = vmatpush2.bf16.msra.mxu0 %v433
        %503 = vmatprep.subr.bf16.mxu0 0
        %504 = vmatpush2.bf16.msra.mxu0 %v432
        %505 = vmatprep.subr.bf16.mxu0 0
        %506 = vmatpush2.bf16.msra.mxu0 %v431
        %507 = vmatprep.subr.bf16.mxu0 0
        %508 = vmatpush2.bf16.msra.mxu0 %v430
        %509 = vmatprep.subr.bf16.mxu0 0
        %510 = vmatpush2.bf16.msra.mxu0 %v429
        %511 = vmatprep.subr.bf16.mxu0 0
        %512 = vmatpush2.bf16.msra.mxu0 %v428
        %513 = vmatprep.subr.bf16.mxu0 0
        %514 = vmatpush2.bf16.msra.mxu0 %v427
        %515 = vmatprep.mubr.bf16.mxu0 %v284
        %516 = vmatmul.mubr.bf16.gmra.mxu0 %v277
        %v517 = vpop.f32.mrf.mxu0
        %v518 = vadd.f32 0.0, %v517
        %v519 = vpop.f32.mrf.mxu0
        %v520 = vpop.f32.mrf.mxu0
        %v521 = vpop.f32.mrf.mxu0
        %522 = vdwg.mxu0
        %523 = vmatprep.subr.bf16.mxu0 0
        %524 = vmatpush1.bf16.msra.mxu0 %v442
        %525 = vmatprep.subr.bf16.mxu0 0
        %526 = vmatpush1.bf16.msra.mxu0 %v441
        %527 = vmatprep.subr.bf16.mxu0 0
        %528 = vmatpush1.bf16.msra.mxu0 %v440
        %529 = vmatprep.subr.bf16.mxu0 0
        %530 = vmatpush1.bf16.msra.mxu0 %v439
        %531 = vmatprep.subr.bf16.mxu0 0
        %532 = vmatpush1.bf16.msra.mxu0 %v438
        %533 = vmatprep.subr.bf16.mxu0 0
        %534 = vmatpush1.bf16.msra.mxu0 %v437
        %535 = vmatprep.subr.bf16.mxu0 0
        %536 = vmatpush1.bf16.msra.mxu0 %v436
        %537 = vmatprep.subr.bf16.mxu0 0
        %538 = vmatpush1.bf16.msra.mxu0 %v435
        %539 = vmatprep.subr.bf16.mxu0 0
        %540 = vmatpush2.bf16.msra.mxu0 %v450
        %541 = vmatprep.subr.bf16.mxu0 0
        %542 = vmatpush2.bf16.msra.mxu0 %v449
        %543 = vmatprep.subr.bf16.mxu0 0
        %544 = vmatpush2.bf16.msra.mxu0 %v448
        %545 = vmatprep.subr.bf16.mxu0 0
        %546 = vmatpush2.bf16.msra.mxu0 %v447
        %547 = vmatprep.subr.bf16.mxu0 0
        %548 = vmatpush2.bf16.msra.mxu0 %v446
        %549 = vmatprep.subr.bf16.mxu0 0
        %550 = vmatpush2.bf16.msra.mxu0 %v445
        %551 = vmatprep.subr.bf16.mxu0 0
        %552 = vmatpush2.bf16.msra.mxu0 %v444
        %553 = vmatprep.subr.bf16.mxu0 0
        %554 = vmatpush2.bf16.msra.mxu0 %v443
        %555 = vmatprep.mubr.bf16.mxu0 %v286
        %556 = vmatmul.mubr.bf16.gmra.mxu0 %v285
        %v557 = vpop.f32.mrf.mxu0
        %v558 = vadd.f32 %v518, %v557
        %v559 = vpop.f32.mrf.mxu0
        %v560 = vpop.f32.mrf.mxu0
        %v561 = vpop.f32.mrf.mxu0
        %562 = vdwg.mxu0
        %v563 = vadd.f32 %v196, %v558
        %vm564 = vcmask 517120
        %565 = vst.msk [vmem:[%s173] sm:$0x3] %vm564, %v563
        %s566 = sand.u32 %s92, 1
        %s567 = scalar_lea.sflag [#allocation3], %s566
        %s568 = sand.u32 %s92, 1
        %s569 = smul.addr %s568, 2
        %s570 = scalar_lea.vmem [#allocation2], %s569
        // Predicated region
        $region33: #{tpu_custom_call.1} parent=27 // pred_check
          %p571 = pneg %p102
        $region34: #{tpu_custom_call.1} parent=27 // pred_check_branch
          %573 = sbr.rel (%p571) target = $region36
        $region35: #{tpu_custom_call.1} parent=27 // pred_region
          %s575 = ssub.s32 32, 32
          %576 = vsyncadd %s567, %s575
          %s577 = smul.addr %s20, 32
          %s578 = scalar_lea.hbm %s2, %s577
          %s580 = sshll.u32 %s570, 4
          %s581 = int_to_ptr.vmem [resolvable:$true] %s580
          %583 = dma.vmem_to_hbm [thread:$0]  %s581, 32, %s578, %s567
        $region36: #{tpu_custom_call.1} parent=27 // pred_fallthru
          _
      $region28: #{tpu_custom_call.1} parent=5 // pred_fallthru
        _
      %p584 = scmp.le.s32.totalorder 2, %s11
      // Predicated region
      $region37: #{tpu_custom_call.1} parent=5 // pred_check
        %p585 = pneg %p584
      $region38: #{tpu_custom_call.1} parent=5 // pred_check_branch
        %587 = sbr.rel (%p585) target = $region40
      $region39: #{tpu_custom_call.1} parent=5 // pred_region
        %s588 = ssub.s32 %s11, 2
        // Predicated region
        $region41: #{tpu_custom_call.1} parent=39 // pred_check
          %p589 = pneg %p108
        $region42: #{tpu_custom_call.1} parent=39 // pred_check_branch
          %591 = sbr.rel (%p589) target = $region44
        $region43: #{tpu_custom_call.1} parent=39 // pred_region
          %s592 = sand.u32 %s93, 1
          %s593 = scalar_lea.sflag [#allocation3], %s592
          %s594 = sand.u32 %s93, 1
          %s595 = smul.addr %s594, 2
          %s596 = scalar_lea.vmem [#allocation2], %s595
          %597 = dma.done %s593, 32
        $region44: #{tpu_custom_call.1} parent=39 // pred_fallthru
          _
      $region40: #{tpu_custom_call.1} parent=5 // pred_fallthru
        _
    $region6: #{tpu_custom_call.1} parent=1 // loop_footer
      %s15 = sadd.s32 1, %s11
    $region7: #{tpu_custom_call.1} parent=1 // loop_footer_branch
      %10 = sbr.rel target = $region3
    $region8: #{tpu_custom_call.1} parent=1 // loop_exit
      _
    %598 = vsyncpa [#allocation3], 1
    %s599 = scalar_lea.sflag [#allocation3], 1
    %600 = vsyncpa %s599, 1

</llo_original>
